<compile_context>
chip_gen: v6e
topology: v6e:2x2x1
jax: 0.10.0
libtpu: 0.0.40
codegen_flags: <defaults>
</compile_context>

<pallas_src>
import jax
import jax.numpy as jnp
import numpy as np
from jax.experimental import pallas as pl
from jax.experimental.pallas import tpu as pltpu


# ---------------------------------------------------------------------------
# Fused kernel: per-tile gate MLP (tiny, batch-constant) + broadcast multiply.
# ---------------------------------------------------------------------------
def _fused_kernel(
    ctx1_ref, ctx2_ref,
    w1a_ref, b1a_ref, w2a_ref, b2a_ref,   # fs1_gate params: E->H->W (W lane-padded)
    w1b_ref, b1b_ref, w2b_ref, b2b_ref,   # fs2_gate params: E->H->W
    flat_ref,                              # (tb, W) tile of the flattened embeddings
    out1_ref, out2_ref,
):
    def gate_row(ctx, w1, b1, w2, b2):
        h = jnp.maximum(jnp.dot(ctx, w1, preferred_element_type=jnp.float32) + b1, 0.0)
        z = jnp.dot(h, w2, preferred_element_type=jnp.float32) + b2
        # ctx rows are identical -> all 8 rows of the gate are identical; keep row 0.
        return (jax.nn.sigmoid(z) * 2.0)[0:1, :]

    g1 = gate_row(ctx1_ref[...], w1a_ref[...], b1a_ref[...], w2a_ref[...], b2a_ref[...])
    g2 = gate_row(ctx2_ref[...], w1b_ref[...], b1b_ref[...], w2b_ref[...], b2b_ref[...])

    flat = flat_ref[...]
    out1_ref[...] = (flat * g1).astype(out1_ref.dtype)   # (1, W) broadcasts over sublanes
    out2_ref[...] = (flat * g2).astype(out2_ref.dtype)


# ---------------------------------------------------------------------------
# Wrapper helpers.
# ---------------------------------------------------------------------------
def _vmem_capacity_bytes():
    try:
        info = pltpu.get_tpu_info()
        cap = getattr(info, "vmem_capacity_bytes", None)
        if cap:
            return int(cap)
    except Exception:
        pass
    return 64 << 20   # conservative default (v7x per-core VMEM)


def _choose_tile_rows(rows, lane_w, tile_budget):
    """Rows per grid step: big (2-4+ MiB/stream) but budgeted and >=2 grid steps."""
    bytes_per_row = 3 * lane_w * 4              # flat in + 2 outs, f32 worst case
    tb = tile_budget // (2 * bytes_per_row)     # double-buffered
    tb = max(8, (tb // 8) * 8)
    if rows < 8:
        return rows                             # full-array block is legal
    if rows >= 16:
        # guarantee >= 2 grid steps so v7x's two TensorCores both get work
        half8 = max(8, (rows // 2 // 8) * 8)
        tb = min(tb, half8)
    tb = min(tb, max(8, (rows // 8) * 8))
    return tb


def feature_selection(flat_emb, fs1_ctx_bias, fs2_ctx_bias, params, *, tb=None):
    """flat_emb: (B, F); fs*_ctx_bias: (1, E); params: dict of gate weights (f32)."""
    B, F = flat_emb.shape
    E = fs1_ctx_bias.shape[1]
    out_dtype = jnp.promote_types(flat_emb.dtype, jnp.float32)

    # --- Lane-dense packing: (B, F) -> (rows, W) with W a multiple of 128 if possible.
    if F % 128 == 0:
        reps, W, rows = 1, F, B
        flat_r = flat_emb
    elif 128 % F == 0 and (B * F) % 128 == 0:
        reps = 128 // F
        W, rows = 128, (B * F) // 128
        flat_r = flat_emb.reshape(rows, W)
    else:
        reps, W, rows = 1, F, B          # fallback: correct, but masked lane stores
        flat_r = flat_emb

    # Tile the gate's output-layer params so the in-kernel gate row is already W wide
    # (periodic pattern gt[c % F] along the packed lane axis).  No in-kernel concat/tile.
    def _tile_out(w2, b2):
        if reps == 1:
            return w2.astype(jnp.float32), b2.astype(jnp.float32)
        return (jnp.tile(w2.astype(jnp.float32), (1, reps)),
                jnp.tile(b2.astype(jnp.float32), (1, reps)))

    w2a_t, b2a_t = _tile_out(params["w2a"], params["b2a"])
    w2b_t, b2b_t = _tile_out(params["w2b"], params["b2b"])
    H = params["w1a"].shape[1]

    # 8-row broadcast of the context bias (sublane-friendly; 8*E floats, negligible).
    ctx1 = jnp.broadcast_to(fs1_ctx_bias.astype(jnp.float32), (8, E))
    ctx2 = jnp.broadcast_to(fs2_ctx_bias.astype(jnp.float32), (8, E))

    # --- Generation-aware tile / VMEM budgets.
    cap = _vmem_capacity_bytes()
    tile_budget = (24 << 20) if cap <= (64 << 20) else (44 << 20)

    if tb is None:
        tb = _choose_tile_rows(rows, W, tile_budget)
    else:
        tb = max(1, min(int(tb), rows))
        if rows >= 8:
            tb = max(8, (tb // 8) * 8)

    grid = (pl.cdiv(rows, tb),)

    const_bytes = 4 * (2 * 8 * E + 2 * E * H + 2 * H + 2 * H * W + 2 * W)
    stream_bytes = 2 * 3 * tb * W * 4                      # double-buffered in + 2 outs
    vmem_limit = int(min(max(stream_bytes + 2 * const_bytes + (4 << 20), 16 << 20),
                         cap - (16 << 20)))

    def _const(shape):
        return pl.BlockSpec(shape, lambda i: (0, 0))

    row_spec = pl.BlockSpec((tb, W), lambda i: (i, 0))

    out1_r, out2_r = pl.pallas_call(
        _fused_kernel,
        out_shape=[
            jax.ShapeDtypeStruct((rows, W), out_dtype),
            jax.ShapeDtypeStruct((rows, W), out_dtype),
        ],
        grid_spec=pltpu.PrefetchScalarGridSpec(
            num_scalar_prefetch=0,
            grid=grid,
            in_specs=[
                _const((8, E)), _const((8, E)),
                _const((E, H)), _const((1, H)), _const((H, W)), _const((1, W)),
                _const((E, H)), _const((1, H)), _const((H, W)), _const((1, W)),
                row_spec,
            ],
            out_specs=[row_spec, row_spec],
        ),
        compiler_params=pltpu.CompilerParams(
            dimension_semantics=("parallel",),
            vmem_limit_bytes=vmem_limit,
        ),
    )(
        ctx1, ctx2,
        params["w1a"].astype(jnp.float32), params["b1a"].astype(jnp.float32), w2a_t, b2a_t,
        params["w1b"].astype(jnp.float32), params["b1b"].astype(jnp.float32), w2b_t, b2b_t,
        flat_r,
    )

    if reps != 1:
        out1_r = out1_r.reshape(B, F)
        out2_r = out2_r.reshape(B, F)
    return out1_r, out2_r


# ---------------------------------------------------------------------------
# Pure-JAX reference.
# ---------------------------------------------------------------------------
def _reference(flat_emb, ctx_bias1, ctx_bias2, p):
    B = flat_emb.shape[0]

    def gate(ctx, w1, b1, w2, b2):
        h = jnp.maximum(ctx @ w1 + b1, 0.0)
        return jax.nn.sigmoid(h @ w2 + b2) * 2.0

    c1 = jnp.broadcast_to(ctx_bias1, (B, ctx_bias1.shape[1]))
    c2 = jnp.broadcast_to(ctx_bias2, (B, ctx_bias2.shape[1]))
    g1 = gate(c1, p["w1a"], p["b1a"], p["w2a"], p["b2a"])
    g2 = gate(c2, p["w1b"], p["b1b"], p["w2b"], p["b2b"])
    return flat_emb * g1, flat_emb * g2


if __name__ == "__main__":
    # Small shapes: batch=40, embedding_dim=16, num_fields=4 -> feature_dim=64,
    # fs_hidden_units=[32].  B=40 exercises the multi-step grid + a partial last tile
    # on the lane-packed (20, 128) view.
    B, E, F, H = 40, 16, 64, 32

    key = jax.random.PRNGKey(0)
    k_flat, k_w1a, k_b1a, k_w2a, k_b2a, k_w1b, k_b1b, k_w2b, k_b2b = \
        jax.random.split(key, 9)

    flat_emb = jax.random.normal(k_flat, (B, F), dtype=jnp.float32)

    # Module __init__: fs*_ctx_bias = zeros(1, embedding_dim)
    fs1_ctx_bias = jnp.zeros((1, E), dtype=jnp.float32)
    fs2_ctx_bias = jnp.zeros((1, E), dtype=jnp.float32)

    scale = 0.1
    params = {
        "w1a": scale * jax.random.normal(k_w1a, (E, H), dtype=jnp.float32),
        "b1a": scale * jax.random.normal(k_b1a, (1, H), dtype=jnp.float32),
        "w2a": scale * jax.random.normal(k_w2a, (H, F), dtype=jnp.float32),
        "b2a": scale * jax.random.normal(k_b2a, (1, F), dtype=jnp.float32),
        "w1b": scale * jax.random.normal(k_w1b, (E, H), dtype=jnp.float32),
        "b1b": scale * jax.random.normal(k_b1b, (1, H), dtype=jnp.float32),
        "w2b": scale * jax.random.normal(k_w2b, (H, F), dtype=jnp.float32),
        "b2b": scale * jax.random.normal(k_b2b, (1, F), dtype=jnp.float32),
    }

    feat1, feat2 = feature_selection(flat_emb, fs1_ctx_bias, fs2_ctx_bias, params)
    jax.block_until_ready((feat1, feat2))

    ref1, ref2 = _reference(flat_emb, fs1_ctx_bias, fs2_ctx_bias, params)
    np.testing.assert_allclose(np.asarray(feat1), np.asarray(ref1), rtol=1e-5, atol=1e-5)
    np.testing.assert_allclose(np.asarray(feat2), np.asarray(ref2), rtol=1e-5, atol=1e-5)

    print("KERNEL_OK")
</pallas_src>

<mosaic_0001>
module attributes {stable_mosaic.version = 11 : i64} {
  func.func @_fused_kernel(%arg0: i32, %arg1: memref<8x16xf32, #tpu.memory_space<vmem>>, %arg2: memref<8x16xf32, #tpu.memory_space<vmem>>, %arg3: memref<16x32xf32, #tpu.memory_space<vmem>>, %arg4: memref<1x32xf32, #tpu.memory_space<vmem>>, %arg5: memref<32x128xf32, #tpu.memory_space<vmem>>, %arg6: memref<1x128xf32, #tpu.memory_space<vmem>>, %arg7: memref<16x32xf32, #tpu.memory_space<vmem>>, %arg8: memref<1x32xf32, #tpu.memory_space<vmem>>, %arg9: memref<32x128xf32, #tpu.memory_space<vmem>>, %arg10: memref<1x128xf32, #tpu.memory_space<vmem>>, %arg11: memref<8x128xf32, #tpu.memory_space<vmem>>, %arg12: memref<8x128xf32, #tpu.memory_space<vmem>>, %arg13: memref<8x128xf32, #tpu.memory_space<vmem>>) attributes {dimension_semantics = [#tpu.dimension_semantics<parallel>], iteration_bounds = array<i64: 3>, scalar_prefetch = 0 : i64, scratch_operands = 0 : i64, tpu.core_type = #tpu.core_type<tc>, window_params = [{pipeline_mode = #tpu.pipeline_mode<synchronous>, transform_indices = @transform_0, window_bounds = array<i64: 8, 16>}, {pipeline_mode = #tpu.pipeline_mode<synchronous>, transform_indices = @transform_1, window_bounds = array<i64: 8, 16>}, {pipeline_mode = #tpu.pipeline_mode<synchronous>, transform_indices = @transform_2, window_bounds = array<i64: 16, 32>}, {pipeline_mode = #tpu.pipeline_mode<synchronous>, transform_indices = @transform_3, window_bounds = array<i64: 1, 32>}, {pipeline_mode = #tpu.pipeline_mode<synchronous>, transform_indices = @transform_4, window_bounds = array<i64: 32, 128>}, {pipeline_mode = #tpu.pipeline_mode<synchronous>, transform_indices = @transform_5, window_bounds = array<i64: 1, 128>}, {pipeline_mode = #tpu.pipeline_mode<synchronous>, transform_indices = @transform_6, window_bounds = array<i64: 16, 32>}, {pipeline_mode = #tpu.pipeline_mode<synchronous>, transform_indices = @transform_7, window_bounds = array<i64: 1, 32>}, {pipeline_mode = #tpu.pipeline_mode<synchronous>, transform_indices = @transform_8, window_bounds = array<i64: 32, 128>}, {pipeline_mode = #tpu.pipeline_mode<synchronous>, transform_indices = @transform_9, window_bounds = array<i64: 1, 128>}, {transform_indices = @transform_10, window_bounds = array<i64: 8, 128>}, {transform_indices = @transform_11, window_bounds = array<i64: 8, 128>}, {transform_indices = @transform_12, window_bounds = array<i64: 8, 128>}]} {
    %c0 = arith.constant 0 : index
    %c0_0 = arith.constant 0 : index
    %0 = vector.load %arg1[%c0, %c0_0] : memref<8x16xf32, #tpu.memory_space<vmem>>, vector<8x16xf32>
    %c0_1 = arith.constant 0 : index
    %c0_2 = arith.constant 0 : index
    %1 = vector.load %arg3[%c0_1, %c0_2] : memref<16x32xf32, #tpu.memory_space<vmem>>, vector<16x32xf32>
    %c0_3 = arith.constant 0 : index
    %c0_4 = arith.constant 0 : index
    %2 = vector.load %arg4[%c0_3, %c0_4] : memref<1x32xf32, #tpu.memory_space<vmem>>, vector<1x32xf32>
    %c0_5 = arith.constant 0 : index
    %c0_6 = arith.constant 0 : index
    %3 = vector.load %arg5[%c0_5, %c0_6] : memref<32x128xf32, #tpu.memory_space<vmem>>, vector<32x128xf32>
    %c0_7 = arith.constant 0 : index
    %c0_8 = arith.constant 0 : index
    %4 = vector.load %arg6[%c0_7, %c0_8] : memref<1x128xf32, #tpu.memory_space<vmem>>, vector<1x128xf32>
    %cst = arith.constant dense<0.000000e+00> : vector<8x32xf32>
    %5 = tpu.matmul %0, %1, %cst {dimension_numbers = #tpu.dot_dimension_numbers<[1], [0], [0], [1], [0, 0, 1, 1], [], []>} : vector<8x16xf32>, vector<16x32xf32>, vector<8x32xf32> -> vector<8x32xf32>
    %6 = vector.broadcast %2 : vector<1x32xf32> to vector<8x32xf32>
    %7 = arith.addf %5, %6 : vector<8x32xf32>
    %cst_9 = arith.constant 0.000000e+00 : f32
    %8 = vector.broadcast %cst_9 : f32 to vector<8x32xf32>
    %9 = arith.maximumf %7, %8 : vector<8x32xf32>
    %cst_10 = arith.constant dense<0.000000e+00> : vector<8x128xf32>
    %10 = tpu.matmul %9, %3, %cst_10 {dimension_numbers = #tpu.dot_dimension_numbers<[1], [0], [0], [1], [0, 0, 1, 1], [], []>} : vector<8x32xf32>, vector<32x128xf32>, vector<8x128xf32> -> vector<8x128xf32>
    %11 = vector.broadcast %4 : vector<1x128xf32> to vector<8x128xf32>
    %12 = arith.addf %10, %11 : vector<8x128xf32>
    %13 = arith.negf %12 : vector<8x128xf32>
    %14 = math.exp %13 : vector<8x128xf32>
    %cst_11 = arith.constant 1.000000e+00 : f32
    %15 = vector.broadcast %cst_11 : f32 to vector<8x128xf32>
    %16 = arith.addf %15, %14 : vector<8x128xf32>
    %17 = arith.divf %15, %16 : vector<8x128xf32>
    %cst_12 = arith.constant 2.000000e+00 : f32
    %18 = vector.broadcast %cst_12 : f32 to vector<8x128xf32>
    %19 = arith.mulf %17, %18 : vector<8x128xf32>
    %20 = vector.extract_strided_slice %19 {offsets = [0, 0], sizes = [1, 128], strides = [1, 1]} : vector<8x128xf32> to vector<1x128xf32>
    %c0_13 = arith.constant 0 : index
    %c0_14 = arith.constant 0 : index
    %21 = vector.load %arg2[%c0_13, %c0_14] : memref<8x16xf32, #tpu.memory_space<vmem>>, vector<8x16xf32>
    %c0_15 = arith.constant 0 : index
    %c0_16 = arith.constant 0 : index
    %22 = vector.load %arg7[%c0_15, %c0_16] : memref<16x32xf32, #tpu.memory_space<vmem>>, vector<16x32xf32>
    %c0_17 = arith.constant 0 : index
    %c0_18 = arith.constant 0 : index
    %23 = vector.load %arg8[%c0_17, %c0_18] : memref<1x32xf32, #tpu.memory_space<vmem>>, vector<1x32xf32>
    %c0_19 = arith.constant 0 : index
    %c0_20 = arith.constant 0 : index
    %24 = vector.load %arg9[%c0_19, %c0_20] : memref<32x128xf32, #tpu.memory_space<vmem>>, vector<32x128xf32>
    %c0_21 = arith.constant 0 : index
    %c0_22 = arith.constant 0 : index
    %25 = vector.load %arg10[%c0_21, %c0_22] : memref<1x128xf32, #tpu.memory_space<vmem>>, vector<1x128xf32>
    %cst_23 = arith.constant dense<0.000000e+00> : vector<8x32xf32>
    %26 = tpu.matmul %21, %22, %cst_23 {dimension_numbers = #tpu.dot_dimension_numbers<[1], [0], [0], [1], [0, 0, 1, 1], [], []>} : vector<8x16xf32>, vector<16x32xf32>, vector<8x32xf32> -> vector<8x32xf32>
    %27 = vector.broadcast %23 : vector<1x32xf32> to vector<8x32xf32>
    %28 = arith.addf %26, %27 : vector<8x32xf32>
    %cst_24 = arith.constant 0.000000e+00 : f32
    %29 = vector.broadcast %cst_24 : f32 to vector<8x32xf32>
    %30 = arith.maximumf %28, %29 : vector<8x32xf32>
    %cst_25 = arith.constant dense<0.000000e+00> : vector<8x128xf32>
    %31 = tpu.matmul %30, %24, %cst_25 {dimension_numbers = #tpu.dot_dimension_numbers<[1], [0], [0], [1], [0, 0, 1, 1], [], []>} : vector<8x32xf32>, vector<32x128xf32>, vector<8x128xf32> -> vector<8x128xf32>
    %32 = vector.broadcast %25 : vector<1x128xf32> to vector<8x128xf32>
    %33 = arith.addf %31, %32 : vector<8x128xf32>
    %34 = arith.negf %33 : vector<8x128xf32>
    %35 = math.exp %34 : vector<8x128xf32>
    %cst_26 = arith.constant 1.000000e+00 : f32
    %36 = vector.broadcast %cst_26 : f32 to vector<8x128xf32>
    %37 = arith.addf %36, %35 : vector<8x128xf32>
    %38 = arith.divf %36, %37 : vector<8x128xf32>
    %cst_27 = arith.constant 2.000000e+00 : f32
    %39 = vector.broadcast %cst_27 : f32 to vector<8x128xf32>
    %40 = arith.mulf %38, %39 : vector<8x128xf32>
    %41 = vector.extract_strided_slice %40 {offsets = [0, 0], sizes = [1, 128], strides = [1, 1]} : vector<8x128xf32> to vector<1x128xf32>
    %c0_28 = arith.constant 0 : index
    %c0_29 = arith.constant 0 : index
    %42 = vector.load %arg11[%c0_28, %c0_29] : memref<8x128xf32, #tpu.memory_space<vmem>>, vector<8x128xf32>
    %43 = vector.broadcast %20 : vector<1x128xf32> to vector<8x128xf32>
    %44 = arith.mulf %42, %43 : vector<8x128xf32>
    %c0_30 = arith.constant 0 : index
    %c0_31 = arith.constant 0 : index
    %45 = vector.load %arg12[%c0_30, %c0_31] : memref<8x128xf32, #tpu.memory_space<vmem>>, vector<8x128xf32>
    tpu.vector_store %arg12[%c0_30, %c0_31], %44 {strides = array<i32>} : memref<8x128xf32, #tpu.memory_space<vmem>>, vector<8x128xf32>,
    %46 = vector.broadcast %41 : vector<1x128xf32> to vector<8x128xf32>
    %47 = arith.mulf %42, %46 : vector<8x128xf32>
    %c0_32 = arith.constant 0 : index
    %c0_33 = arith.constant 0 : index
    %48 = vector.load %arg13[%c0_32, %c0_33] : memref<8x128xf32, #tpu.memory_space<vmem>>, vector<8x128xf32>
    tpu.vector_store %arg13[%c0_32, %c0_33], %47 {strides = array<i32>} : memref<8x128xf32, #tpu.memory_space<vmem>>, vector<8x128xf32>,
    return
  }
  func.func @transform_0(%arg0: i32) -> (i32, i32) {
    %c0_i32 = arith.constant 0 : i32
    %c0_i32_0 = arith.constant 0 : i32
    %c0_i32_1 = arith.constant 0 : i32
    return %c0_i32, %c0_i32_0 : i32, i32
  }
  func.func @transform_1(%arg0: i32) -> (i32, i32) {
    %c0_i32 = arith.constant 0 : i32
    %c0_i32_0 = arith.constant 0 : i32
    %c0_i32_1 = arith.constant 0 : i32
    return %c0_i32, %c0_i32_0 : i32, i32
  }
  func.func @transform_2(%arg0: i32) -> (i32, i32) {
    %c0_i32 = arith.constant 0 : i32
    %c0_i32_0 = arith.constant 0 : i32
    %c0_i32_1 = arith.constant 0 : i32
    return %c0_i32, %c0_i32_0 : i32, i32
  }
  func.func @transform_3(%arg0: i32) -> (i32, i32) {
    %c0_i32 = arith.constant 0 : i32
    %c0_i32_0 = arith.constant 0 : i32
    %c0_i32_1 = arith.constant 0 : i32
    return %c0_i32, %c0_i32_0 : i32, i32
  }
  func.func @transform_4(%arg0: i32) -> (i32, i32) {
    %c0_i32 = arith.constant 0 : i32
    %c0_i32_0 = arith.constant 0 : i32
    %c0_i32_1 = arith.constant 0 : i32
    return %c0_i32, %c0_i32_0 : i32, i32
  }
  func.func @transform_5(%arg0: i32) -> (i32, i32) {
    %c0_i32 = arith.constant 0 : i32
    %c0_i32_0 = arith.constant 0 : i32
    %c0_i32_1 = arith.constant 0 : i32
    return %c0_i32, %c0_i32_0 : i32, i32
  }
  func.func @transform_6(%arg0: i32) -> (i32, i32) {
    %c0_i32 = arith.constant 0 : i32
    %c0_i32_0 = arith.constant 0 : i32
    %c0_i32_1 = arith.constant 0 : i32
    return %c0_i32, %c0_i32_0 : i32, i32
  }
  func.func @transform_7(%arg0: i32) -> (i32, i32) {
    %c0_i32 = arith.constant 0 : i32
    %c0_i32_0 = arith.constant 0 : i32
    %c0_i32_1 = arith.constant 0 : i32
    return %c0_i32, %c0_i32_0 : i32, i32
  }
  func.func @transform_8(%arg0: i32) -> (i32, i32) {
    %c0_i32 = arith.constant 0 : i32
    %c0_i32_0 = arith.constant 0 : i32
    %c0_i32_1 = arith.constant 0 : i32
    return %c0_i32, %c0_i32_0 : i32, i32
  }
  func.func @transform_9(%arg0: i32) -> (i32, i32) {
    %c0_i32 = arith.constant 0 : i32
    %c0_i32_0 = arith.constant 0 : i32
    %c0_i32_1 = arith.constant 0 : i32
    return %c0_i32, %c0_i32_0 : i32, i32
  }
  func.func @transform_10(%arg0: i32) -> (i32, i32) {
    %c0_i32 = arith.constant 0 : i32
    %c0_i32_0 = arith.constant 0 : i32
    return %arg0, %c0_i32 : i32, i32
  }
  func.func @transform_11(%arg0: i32) -> (i32, i32) {
    %c0_i32 = arith.constant 0 : i32
    %c0_i32_0 = arith.constant 0 : i32
    return %arg0, %c0_i32 : i32, i32
  }
  func.func @transform_12(%arg0: i32) -> (i32, i32) {
    %c0_i32 = arith.constant 0 : i32
    %c0_i32_0 = arith.constant 0 : i32
    return %arg0, %c0_i32 : i32, i32
  }
}

</mosaic_0001>

<llo_original>
// kernel: tpu_custom_call.1
$region0: #{tpu_custom_call.1}
  #allocation0 [shape = 'u32[]', space=smem, size = 0x4, offset = 0x4, fixed_abs, tag = 'smem constant byte address 0x4 - core index']
  #allocation1 [shape = 'u32[144,128]{1,0:T(1,128)}', space=vmem, size = 0x12000, scoped, tag = 'internal scratch']
  %s0 = inlined_call_operand.hbm [shape: f32[8,16], index: 0, kind: input, shape index: {}]
  %s1 = inlined_call_operand.hbm [shape: f32[8,16], index: 1, kind: input, shape index: {}]
  %s2 = inlined_call_operand.hbm [shape: f32[16,32], index: 2, kind: input, shape index: {}]
  %s3 = inlined_call_operand.vmem [shape: f32[1,32], index: 3, kind: input, shape index: {}]
  %s4 = inlined_call_operand.hbm [shape: f32[32,128], index: 4, kind: input, shape index: {}]
  %s5 = inlined_call_operand.vmem [shape: f32[1,128], index: 5, kind: input, shape index: {}]
  %s6 = inlined_call_operand.hbm [shape: f32[16,32], index: 6, kind: input, shape index: {}]
  %s7 = inlined_call_operand.vmem [shape: f32[1,32], index: 7, kind: input, shape index: {}]
  %s8 = inlined_call_operand.hbm [shape: f32[32,128], index: 8, kind: input, shape index: {}]
  %s9 = inlined_call_operand.vmem [shape: f32[1,128], index: 9, kind: input, shape index: {}]
  %s10 = inlined_call_operand.hbm [shape: f32[20,128], index: 10, kind: input, shape index: {}]
  %s11 = inlined_call_operand.hbm [shape: f32[20,128], index: 11, kind: output, shape index: {0}]
  %s12 = inlined_call_operand.hbm [shape: f32[20,128], index: 12, kind: output, shape index: {1}]
  %13 = xla_tuple %s11, %s12
  %s14 = sld [smem:[#allocation0]]
  $region113: #{tpu_custom_call.1} parent=0
    _
  %s16 = ssub.s32 1, %s14
  %s17 = scalar_select 0, %s16, %s14
  $region1: #{tpu_custom_call.1} parent=0
    #allocation2 [shape = 'u8[4096]{0}', space=vmem, size = 0x1000, scoped, tag = 'input window, operand 0, single buffered']
    #allocation3 [shape = 's32[2]{0}', space=sflag, size = 0x8, scoped, tag = 'scoped memory for tpu_custom_call.1']
    #allocation4 [shape = 's32[2]{0}', space=sflag, size = 0x8, scoped, tag = 'scoped memory for tpu_custom_call.1']
    #allocation5 [shape = 'u8[4096]{0}', space=vmem, size = 0x1000, scoped, tag = 'input window, operand 1, single buffered']
    #allocation6 [shape = 's32[1]{0}', space=sflag, size = 0x4, scoped, tag = 'scoped memory for tpu_custom_call.1']
    #allocation7 [shape = 'u8[8192]{0}', space=vmem, size = 0x2000, scoped, tag = 'input window, operand 2, single buffered']
    #allocation8 [shape = 'u8[16384]{0}', space=vmem, size = 0x4000, scoped, tag = 'input window, operand 4, single buffered']
    #allocation9 [shape = 's32[1]{0}', space=sflag, size = 0x4, scoped, tag = 'scoped memory for tpu_custom_call.1']
    #allocation10 [shape = 'u8[8192]{0}', space=vmem, size = 0x2000, scoped, tag = 'input window, operand 6, single buffered']
    #allocation11 [shape = 'u8[16384]{0}', space=vmem, size = 0x4000, scoped, tag = 'input window, operand 8, single buffered']
    #allocation12 [shape = 's32[1]{0}', space=sflag, size = 0x4, scoped, tag = 'scoped memory for tpu_custom_call.1']
    #allocation13 [shape = 'u8[8192]{0}', space=vmem, size = 0x2000, scoped, tag = 'input window, operand 10']
    #allocation14 [shape = 'u8[8192]{0}', space=vmem, size = 0x2000, scoped, tag = 'output window, operand 0']
    #allocation15 [shape = 'u8[8192]{0}', space=vmem, size = 0x2000, scoped, tag = 'output window, operand 1']
    #allocation16 [shape = 's32[2]{0}', space=sflag, size = 0x8, scoped, tag = 'scoped memory for tpu_custom_call.1']
    %18 = vsyncpa [#allocation3], 0
    %19 = vsyncpa [#allocation6], 0
    %20 = vsyncpa [#allocation9], 0
    %21 = vsyncpa [#allocation12], 0
    %22 = vsyncpa [#allocation4], 0
    %s23 = scalar_lea.sflag [#allocation4], 1
    %24 = vsyncpa %s23, 0
    %25 = vsyncpa [#allocation16], 0
    %s26 = scalar_lea.sflag [#allocation16], 1
    %27 = vsyncpa %s26, 0
    loop: start=0, step=1, limit=5
    $region2: #{tpu_custom_call.1} parent=1 // loop_pre_header
      _
    $region3: #{tpu_custom_call.1} parent=1 // loop_header
      %s29 = sphi 0, %s33
      %p30 = scmp.ge.s32.totalorder %s29, 5
      %s37 = sphi 0, %s37
      %s39 = sphi 0, %s37
      %s40 = sphi 0, %s39
      %s54 = sphi 0, %s40
      %s58 = sphi 0, %s58
      %s60 = sphi 0, %s58
      %s61 = sphi 0, %s60
      %s75 = sphi 0, %s61
      %s79 = sphi 0, %s79
      %s81 = sphi 0, %s79
      %s82 = sphi 0, %s81
      %s96 = sphi 0, %s82
      %s100 = sphi 0, %s100
      %s102 = sphi 0, %s100
      %s103 = sphi 0, %s102
      %s117 = sphi 0, %s103
      %s121 = sphi 0, %s121
      %s123 = sphi 0, %s121
      %s124 = sphi 0, %s123
      %s138 = sphi 0, %s124
      %s142 = sphi 0, %s142
      %s144 = sphi 0, %s142
      %s145 = sphi 0, %s144
      %s159 = sphi 0, %s145
      %s163 = sphi 0, %s163
      %s165 = sphi 0, %s163
      %s166 = sphi 0, %s165
      %s180 = sphi 0, %s166
      %s184 = sphi 0, %s184
      %s186 = sphi 0, %s184
      %s187 = sphi 0, %s186
      %s201 = sphi 0, %s187
      %s205 = sphi 0, %s205
      %s207 = sphi 0, %s205
      %s208 = sphi 0, %s207
      %s222 = sphi 0, %s208
      %s226 = sphi 0, %s226
      %s228 = sphi 0, %s226
      %s229 = sphi 0, %s228
      %s243 = sphi 0, %s229
      %s249 = sphi 0, %s251
      %s252 = sphi 0, %s249
      %s253 = sphi 0, %s252
      %s269 = sphi 0, %s253
      %s275 = sphi 0, %s277
      %s278 = sphi 0, %s275
      %s279 = sphi 0, %s278
      %s295 = sphi 0, %s279
      %s301 = sphi 0, %s303
      %s304 = sphi 0, %s301
      %s305 = sphi 0, %s304
      %s321 = sphi 0, %s305
    $region4: #{tpu_custom_call.1} parent=1 // loop_header_branch
      %32 = sbr.rel (%p30) target = $region8
    $region5: #{tpu_custom_call.1} parent=1 // loop_body
      %s34 = ssub.s32 %s29, 1
      %s35 = ssub.s32 %s29, 2
      %s36 = sadd.s32 %s29, 1
      %s38 = sadd.s32 %s37, 1
      %p41 = scmp.eq.s32.totalorder %s29, 2
      %p42 = scmp.ne.s32.totalorder %s37, %s39
      %p43 = scmp.eq.s32.totalorder %s29, 0
      %p44 = por %p42, %p43
      %p45 = scmp.ne.s32.totalorder %s37, %s39
      %p46 = scmp.eq.s32.totalorder %s34, 2
      %p47 = por %p45, %p46
      %p48 = scmp.ne.s32.totalorder %s39, %s40
      %p49 = scmp.eq.s32.totalorder %s34, 0
      %p50 = por %p48, %p49
      %p51 = scmp.ne.s32.totalorder %s39, %s40
      %p52 = scmp.eq.s32.totalorder %s35, 2
      %p53 = por %p51, %p52
      %p55 = scmp.ne.s32.totalorder %s40, %s54
      %p56 = scmp.eq.s32.totalorder %s35, 0
      %p57 = por %p55, %p56
      %s59 = sadd.s32 %s58, 1
      %p62 = scmp.eq.s32.totalorder %s29, 2
      %p63 = scmp.ne.s32.totalorder %s58, %s60
      %p64 = scmp.eq.s32.totalorder %s29, 0
      %p65 = por %p63, %p64
      %p66 = scmp.ne.s32.totalorder %s58, %s60
      %p67 = scmp.eq.s32.totalorder %s34, 2
      %p68 = por %p66, %p67
      %p69 = scmp.ne.s32.totalorder %s60, %s61
      %p70 = scmp.eq.s32.totalorder %s34, 0
      %p71 = por %p69, %p70
      %p72 = scmp.ne.s32.totalorder %s60, %s61
      %p73 = scmp.eq.s32.totalorder %s35, 2
      %p74 = por %p72, %p73
      %p76 = scmp.ne.s32.totalorder %s61, %s75
      %p77 = scmp.eq.s32.totalorder %s35, 0
      %p78 = por %p76, %p77
      %s80 = sadd.s32 %s79, 1
      %p83 = scmp.eq.s32.totalorder %s29, 2
      %p84 = scmp.ne.s32.totalorder %s79, %s81
      %p85 = scmp.eq.s32.totalorder %s29, 0
      %p86 = por %p84, %p85
      %p87 = scmp.ne.s32.totalorder %s79, %s81
      %p88 = scmp.eq.s32.totalorder %s34, 2
      %p89 = por %p87, %p88
      %p90 = scmp.ne.s32.totalorder %s81, %s82
      %p91 = scmp.eq.s32.totalorder %s34, 0
      %p92 = por %p90, %p91
      %p93 = scmp.ne.s32.totalorder %s81, %s82
      %p94 = scmp.eq.s32.totalorder %s35, 2
      %p95 = por %p93, %p94
      %p97 = scmp.ne.s32.totalorder %s82, %s96
      %p98 = scmp.eq.s32.totalorder %s35, 0
      %p99 = por %p97, %p98
      %s101 = sadd.s32 %s100, 1
      %p104 = scmp.eq.s32.totalorder %s29, 2
      %p105 = scmp.ne.s32.totalorder %s100, %s102
      %p106 = scmp.eq.s32.totalorder %s29, 0
      %p107 = por %p105, %p106
      %p108 = scmp.ne.s32.totalorder %s100, %s102
      %p109 = scmp.eq.s32.totalorder %s34, 2
      %p110 = por %p108, %p109
      %p111 = scmp.ne.s32.totalorder %s102, %s103
      %p112 = scmp.eq.s32.totalorder %s34, 0
      %p113 = por %p111, %p112
      %p114 = scmp.ne.s32.totalorder %s102, %s103
      %p115 = scmp.eq.s32.totalorder %s35, 2
      %p116 = por %p114, %p115
      %p118 = scmp.ne.s32.totalorder %s103, %s117
      %p119 = scmp.eq.s32.totalorder %s35, 0
      %p120 = por %p118, %p119
      %s122 = sadd.s32 %s121, 1
      %p125 = scmp.eq.s32.totalorder %s29, 2
      %p126 = scmp.ne.s32.totalorder %s121, %s123
      %p127 = scmp.eq.s32.totalorder %s29, 0
      %p128 = por %p126, %p127
      %p129 = scmp.ne.s32.totalorder %s121, %s123
      %p130 = scmp.eq.s32.totalorder %s34, 2
      %p131 = por %p129, %p130
      %p132 = scmp.ne.s32.totalorder %s123, %s124
      %p133 = scmp.eq.s32.totalorder %s34, 0
      %p134 = por %p132, %p133
      %p135 = scmp.ne.s32.totalorder %s123, %s124
      %p136 = scmp.eq.s32.totalorder %s35, 2
      %p137 = por %p135, %p136
      %p139 = scmp.ne.s32.totalorder %s124, %s138
      %p140 = scmp.eq.s32.totalorder %s35, 0
      %p141 = por %p139, %p140
      %s143 = sadd.s32 %s142, 1
      %p146 = scmp.eq.s32.totalorder %s29, 2
      %p147 = scmp.ne.s32.totalorder %s142, %s144
      %p148 = scmp.eq.s32.totalorder %s29, 0
      %p149 = por %p147, %p148
      %p150 = scmp.ne.s32.totalorder %s142, %s144
      %p151 = scmp.eq.s32.totalorder %s34, 2
      %p152 = por %p150, %p151
      %p153 = scmp.ne.s32.totalorder %s144, %s145
      %p154 = scmp.eq.s32.totalorder %s34, 0
      %p155 = por %p153, %p154
      %p156 = scmp.ne.s32.totalorder %s144, %s145
      %p157 = scmp.eq.s32.totalorder %s35, 2
      %p158 = por %p156, %p157
      %p160 = scmp.ne.s32.totalorder %s145, %s159
      %p161 = scmp.eq.s32.totalorder %s35, 0
      %p162 = por %p160, %p161
      %s164 = sadd.s32 %s163, 1
      %p167 = scmp.eq.s32.totalorder %s29, 2
      %p168 = scmp.ne.s32.totalorder %s163, %s165
      %p169 = scmp.eq.s32.totalorder %s29, 0
      %p170 = por %p168, %p169
      %p171 = scmp.ne.s32.totalorder %s163, %s165
      %p172 = scmp.eq.s32.totalorder %s34, 2
      %p173 = por %p171, %p172
      %p174 = scmp.ne.s32.totalorder %s165, %s166
      %p175 = scmp.eq.s32.totalorder %s34, 0
      %p176 = por %p174, %p175
      %p177 = scmp.ne.s32.totalorder %s165, %s166
      %p178 = scmp.eq.s32.totalorder %s35, 2
      %p179 = por %p177, %p178
      %p181 = scmp.ne.s32.totalorder %s166, %s180
      %p182 = scmp.eq.s32.totalorder %s35, 0
      %p183 = por %p181, %p182
      %s185 = sadd.s32 %s184, 1
      %p188 = scmp.eq.s32.totalorder %s29, 2
      %p189 = scmp.ne.s32.totalorder %s184, %s186
      %p190 = scmp.eq.s32.totalorder %s29, 0
      %p191 = por %p189, %p190
      %p192 = scmp.ne.s32.totalorder %s184, %s186
      %p193 = scmp.eq.s32.totalorder %s34, 2
      %p194 = por %p192, %p193
      %p195 = scmp.ne.s32.totalorder %s186, %s187
      %p196 = scmp.eq.s32.totalorder %s34, 0
      %p197 = por %p195, %p196
      %p198 = scmp.ne.s32.totalorder %s186, %s187
      %p199 = scmp.eq.s32.totalorder %s35, 2
      %p200 = por %p198, %p199
      %p202 = scmp.ne.s32.totalorder %s187, %s201
      %p203 = scmp.eq.s32.totalorder %s35, 0
      %p204 = por %p202, %p203
      %s206 = sadd.s32 %s205, 1
      %p209 = scmp.eq.s32.totalorder %s29, 2
      %p210 = scmp.ne.s32.totalorder %s205, %s207
      %p211 = scmp.eq.s32.totalorder %s29, 0
      %p212 = por %p210, %p211
      %p213 = scmp.ne.s32.totalorder %s205, %s207
      %p214 = scmp.eq.s32.totalorder %s34, 2
      %p215 = por %p213, %p214
      %p216 = scmp.ne.s32.totalorder %s207, %s208
      %p217 = scmp.eq.s32.totalorder %s34, 0
      %p218 = por %p216, %p217
      %p219 = scmp.ne.s32.totalorder %s207, %s208
      %p220 = scmp.eq.s32.totalorder %s35, 2
      %p221 = por %p219, %p220
      %p223 = scmp.ne.s32.totalorder %s208, %s222
      %p224 = scmp.eq.s32.totalorder %s35, 0
      %p225 = por %p223, %p224
      %s227 = sadd.s32 %s226, 1
      %p230 = scmp.eq.s32.totalorder %s29, 2
      %p231 = scmp.ne.s32.totalorder %s226, %s228
      %p232 = scmp.eq.s32.totalorder %s29, 0
      %p233 = por %p231, %p232
      %p234 = scmp.ne.s32.totalorder %s226, %s228
      %p235 = scmp.eq.s32.totalorder %s34, 2
      %p236 = por %p234, %p235
      %p237 = scmp.ne.s32.totalorder %s228, %s229
      %p238 = scmp.eq.s32.totalorder %s34, 0
      %p239 = por %p237, %p238
      %p240 = scmp.ne.s32.totalorder %s228, %s229
      %p241 = scmp.eq.s32.totalorder %s35, 2
      %p242 = por %p240, %p241
      %p244 = scmp.ne.s32.totalorder %s229, %s243
      %p245 = scmp.eq.s32.totalorder %s35, 0
      %p246 = por %p244, %p245
      %s247 = ssub.s32 %s29, %s36
      %p248 = scmp.eq.s32.totalorder %s247, 0
      %s250 = sadd.s32 %s249, 1
      %s251 = scalar_select %p248, %s249, %s250
      %p254 = pneg %p248
      %p255 = scmp.eq.s32.totalorder %s29, 2
      %p256 = por %p254, %p255
      %p257 = scmp.ne.s32.totalorder %s249, %s252
      %p258 = scmp.eq.s32.totalorder %s29, 0
      %p259 = por %p257, %p258
      %p260 = scmp.ne.s32.totalorder %s249, %s252
      %p261 = scmp.eq.s32.totalorder %s34, 2
      %p262 = por %p260, %p261
      %p263 = scmp.ne.s32.totalorder %s252, %s253
      %p264 = scmp.eq.s32.totalorder %s34, 0
      %p265 = por %p263, %p264
      %p266 = scmp.ne.s32.totalorder %s252, %s253
      %p267 = scmp.eq.s32.totalorder %s35, 2
      %p268 = por %p266, %p267
      %p270 = scmp.ne.s32.totalorder %s253, %s269
      %p271 = scmp.eq.s32.totalorder %s35, 0
      %p272 = por %p270, %p271
      %s273 = ssub.s32 %s29, %s36
      %p274 = scmp.eq.s32.totalorder %s273, 0
      %s276 = sadd.s32 %s275, 1
      %s277 = scalar_select %p274, %s275, %s276
      %p280 = pneg %p274
      %p281 = scmp.eq.s32.totalorder %s29, 2
      %p282 = por %p280, %p281
      %p283 = scmp.ne.s32.totalorder %s275, %s278
      %p284 = scmp.eq.s32.totalorder %s29, 0
      %p285 = por %p283, %p284
      %p286 = scmp.ne.s32.totalorder %s275, %s278
      %p287 = scmp.eq.s32.totalorder %s34, 2
      %p288 = por %p286, %p287
      %p289 = scmp.ne.s32.totalorder %s278, %s279
      %p290 = scmp.eq.s32.totalorder %s34, 0
      %p291 = por %p289, %p290
      %p292 = scmp.ne.s32.totalorder %s278, %s279
      %p293 = scmp.eq.s32.totalorder %s35, 2
      %p294 = por %p292, %p293
      %p296 = scmp.ne.s32.totalorder %s279, %s295
      %p297 = scmp.eq.s32.totalorder %s35, 0
      %p298 = por %p296, %p297
      %s299 = ssub.s32 %s29, %s36
      %p300 = scmp.eq.s32.totalorder %s299, 0
      %s302 = sadd.s32 %s301, 1
      %s303 = scalar_select %p300, %s301, %s302
      %p306 = pneg %p300
      %p307 = scmp.eq.s32.totalorder %s29, 2
      %p308 = por %p306, %p307
      %p309 = scmp.ne.s32.totalorder %s301, %s304
      %p310 = scmp.eq.s32.totalorder %s29, 0
      %p311 = por %p309, %p310
      %p312 = scmp.ne.s32.totalorder %s301, %s304
      %p313 = scmp.eq.s32.totalorder %s34, 2
      %p314 = por %p312, %p313
      %p315 = scmp.ne.s32.totalorder %s304, %s305
      %p316 = scmp.eq.s32.totalorder %s34, 0
      %p317 = por %p315, %p316
      %p318 = scmp.ne.s32.totalorder %s304, %s305
      %p319 = scmp.eq.s32.totalorder %s35, 2
      %p320 = por %p318, %p319
      %p322 = scmp.ne.s32.totalorder %s305, %s321
      %p323 = scmp.eq.s32.totalorder %s35, 0
      %p324 = por %p322, %p323
      %p325 = scmp.le.s32.totalorder 1, %s29
      %p326 = scmp.lt.s32.totalorder %s29, 4
      %p327 = pnand %p325, %p326
      %p328 = pneg %p327
      // Predicated region
      $region9: #{tpu_custom_call.1} parent=5 // pred_check
        _
      $region10: #{tpu_custom_call.1} parent=5 // pred_check_branch
        %330 = sbr.rel (%p327) target = $region12
      $region11: #{tpu_custom_call.1} parent=5 // pred_region
        %s331 = ssub.s32 %s29, 1
        // Predicated region
        $region13: #{tpu_custom_call.1} parent=11 // pred_check
          %p332 = pneg %p50
        $region14: #{tpu_custom_call.1} parent=11 // pred_check_branch
          %334 = sbr.rel (%p332) target = $region16
        $region15: #{tpu_custom_call.1} parent=11 // pred_region
          %s336 = ssub.s32 128, 128
          %337 = vsyncadd [#allocation3], %s336
          %s339 = sshll.u32 [#allocation2], 4
          %s340 = int_to_ptr.vmem [resolvable:$true] %s339
          %342 = dma.hbm_to_vmem [thread:$0]  %s0, 128, %s340, [#allocation3]
        $region16: #{tpu_custom_call.1} parent=11 // pred_fallthru
          _
        // Predicated region
        $region17: #{tpu_custom_call.1} parent=11 // pred_check
          %p343 = pneg %p71
        $region18: #{tpu_custom_call.1} parent=11 // pred_check_branch
          %345 = sbr.rel (%p343) target = $region20
        $region19: #{tpu_custom_call.1} parent=11 // pred_region
          %s347 = ssub.s32 128, 128
          %348 = vsyncadd [#allocation6], %s347
          %s350 = sshll.u32 [#allocation5], 4
          %s351 = int_to_ptr.vmem [resolvable:$true] %s350
          %353 = dma.hbm_to_vmem [thread:$0]  %s1, 128, %s351, [#allocation6]
        $region20: #{tpu_custom_call.1} parent=11 // pred_fallthru
          _
        // Predicated region
        $region21: #{tpu_custom_call.1} parent=11 // pred_check
          %p354 = pneg %p92
        $region22: #{tpu_custom_call.1} parent=11 // pred_check_branch
          %356 = sbr.rel (%p354) target = $region24
        $region23: #{tpu_custom_call.1} parent=11 // pred_region
          %s358 = ssub.s32 256, 256
          %359 = vsyncadd [#allocation6], %s358
          %s360 = sshll.u32 [#allocation7], 4
          %s361 = int_to_ptr.vmem [resolvable:$true] %s360
          %366 = dma.hbm_to_vmem [thread:$0]  %s2, 256, %s361, [#allocation6], 128, 128, 8
        $region24: #{tpu_custom_call.1} parent=11 // pred_fallthru
          _
        // Predicated region
        $region25: #{tpu_custom_call.1} parent=11 // pred_check
          %p367 = pneg %p113
        $region26: #{tpu_custom_call.1} parent=11 // pred_check_branch
          %369 = sbr.rel (%p367) target = $region28
        $region27: #{tpu_custom_call.1} parent=11 // pred_region
          _
        $region28: #{tpu_custom_call.1} parent=11 // pred_fallthru
          _
        // Predicated region
        $region29: #{tpu_custom_call.1} parent=11 // pred_check
          %p370 = pneg %p134
        $region30: #{tpu_custom_call.1} parent=11 // pred_check_branch
          %372 = sbr.rel (%p370) target = $region32
        $region31: #{tpu_custom_call.1} parent=11 // pred_region
          %s374 = ssub.s32 512, 512
          %375 = vsyncadd [#allocation9], %s374
          %s376 = sshll.u32 [#allocation8], 4
          %s377 = int_to_ptr.vmem [resolvable:$true] %s376
          %382 = dma.hbm_to_vmem [thread:$0]  %s4, 512, %s377, [#allocation9], 128, 128, 8
        $region32: #{tpu_custom_call.1} parent=11 // pred_fallthru
          _
        // Predicated region
        $region33: #{tpu_custom_call.1} parent=11 // pred_check
          %p383 = pneg %p155
        $region34: #{tpu_custom_call.1} parent=11 // pred_check_branch
          %385 = sbr.rel (%p383) target = $region36
        $region35: #{tpu_custom_call.1} parent=11 // pred_region
          _
        $region36: #{tpu_custom_call.1} parent=11 // pred_fallthru
          _
        // Predicated region
        $region37: #{tpu_custom_call.1} parent=11 // pred_check
          %p386 = pneg %p176
        $region38: #{tpu_custom_call.1} parent=11 // pred_check_branch
          %388 = sbr.rel (%p386) target = $region40
        $region39: #{tpu_custom_call.1} parent=11 // pred_region
          %s390 = ssub.s32 256, 256
          %391 = vsyncadd [#allocation9], %s390
          %s392 = sshll.u32 [#allocation10], 4
          %s393 = int_to_ptr.vmem [resolvable:$true] %s392
          %398 = dma.hbm_to_vmem [thread:$0]  %s6, 256, %s393, [#allocation9], 128, 128, 8
        $region40: #{tpu_custom_call.1} parent=11 // pred_fallthru
          _
        // Predicated region
        $region41: #{tpu_custom_call.1} parent=11 // pred_check
          %p399 = pneg %p197
        $region42: #{tpu_custom_call.1} parent=11 // pred_check_branch
          %401 = sbr.rel (%p399) target = $region44
        $region43: #{tpu_custom_call.1} parent=11 // pred_region
          _
        $region44: #{tpu_custom_call.1} parent=11 // pred_fallthru
          _
        // Predicated region
        $region45: #{tpu_custom_call.1} parent=11 // pred_check
          %p402 = pneg %p218
        $region46: #{tpu_custom_call.1} parent=11 // pred_check_branch
          %404 = sbr.rel (%p402) target = $region48
        $region47: #{tpu_custom_call.1} parent=11 // pred_region
          %s406 = ssub.s32 512, 512
          %407 = vsyncadd [#allocation12], %s406
          %s408 = sshll.u32 [#allocation11], 4
          %s409 = int_to_ptr.vmem [resolvable:$true] %s408
          %414 = dma.hbm_to_vmem [thread:$0]  %s8, 512, %s409, [#allocation12], 128, 128, 8
        $region48: #{tpu_custom_call.1} parent=11 // pred_fallthru
          _
        // Predicated region
        $region49: #{tpu_custom_call.1} parent=11 // pred_check
          %p415 = pneg %p239
        $region50: #{tpu_custom_call.1} parent=11 // pred_check_branch
          %417 = sbr.rel (%p415) target = $region52
        $region51: #{tpu_custom_call.1} parent=11 // pred_region
          _
        $region52: #{tpu_custom_call.1} parent=11 // pred_fallthru
          _
      $region12: #{tpu_custom_call.1} parent=5 // pred_fallthru
        _
      %p418 = scmp.lt.s32.totalorder %s29, 3
      // Predicated region
      $region53: #{tpu_custom_call.1} parent=5 // pred_check
        %p419 = pneg %p418
      $region54: #{tpu_custom_call.1} parent=5 // pred_check_branch
        %421 = sbr.rel (%p419) target = $region56
      $region55: #{tpu_custom_call.1} parent=5 // pred_region
        // Predicated region
        $region57: #{tpu_custom_call.1} parent=55 // pred_check
          %p422 = pneg %p259
        $region58: #{tpu_custom_call.1} parent=55 // pred_check_branch
          %424 = sbr.rel (%p422) target = $region60
        $region59: #{tpu_custom_call.1} parent=55 // pred_region
          %s425 = sand.u32 %s29, 1
          %s426 = scalar_lea.sflag [#allocation3], %s425
          %s427 = sand.u32 %s249, 1
          %s428 = smul.addr %s427, 8
          %s429 = scalar_lea.vmem [#allocation13], %s428
          %s431 = ssub.s32 128, 128
          %432 = vsyncadd %s426, %s431
          %s433 = smul.addr %s29, 128
          %s434 = scalar_lea.hbm %s10, %s433
          %s436 = sshll.u32 %s429, 4
          %s437 = int_to_ptr.vmem [resolvable:$true] %s436
          %439 = dma.hbm_to_vmem [thread:$0]  %s434, 128, %s437, %s426
        $region60: #{tpu_custom_call.1} parent=55 // pred_fallthru
          _
      $region56: #{tpu_custom_call.1} parent=5 // pred_fallthru
        _
      %p440 = scmp.le.s32.totalorder 1, %s29
      %p441 = scmp.lt.s32.totalorder %s29, 4
      %p442 = pnand %p440, %p441
      %p443 = pneg %p442
      // Predicated region
      $region61: #{tpu_custom_call.1} parent=5 // pred_check
        _
      $region62: #{tpu_custom_call.1} parent=5 // pred_check_branch
        %445 = sbr.rel (%p442) target = $region64
      $region63: #{tpu_custom_call.1} parent=5 // pred_region
        %s446 = ssub.s32 %s29, 1
        // Predicated region
        $region65: #{tpu_custom_call.1} parent=63 // pred_check
          %p447 = pneg %p50
        $region66: #{tpu_custom_call.1} parent=63 // pred_check_branch
          %449 = sbr.rel (%p447) target = $region68
        $region67: #{tpu_custom_call.1} parent=63 // pred_region
          %450 = dma.done [#allocation3], 128
        $region68: #{tpu_custom_call.1} parent=63 // pred_fallthru
          _
        // Predicated region
        $region69: #{tpu_custom_call.1} parent=63 // pred_check
          %p451 = pneg %p71
        $region70: #{tpu_custom_call.1} parent=63 // pred_check_branch
          %453 = sbr.rel (%p451) target = $region72
        $region71: #{tpu_custom_call.1} parent=63 // pred_region
          %454 = dma.done [#allocation6], 128
        $region72: #{tpu_custom_call.1} parent=63 // pred_fallthru
          _
        // Predicated region
        $region73: #{tpu_custom_call.1} parent=63 // pred_check
          %p455 = pneg %p92
        $region74: #{tpu_custom_call.1} parent=63 // pred_check_branch
          %457 = sbr.rel (%p455) target = $region76
        $region75: #{tpu_custom_call.1} parent=63 // pred_region
          %458 = dma.done [#allocation6], 256
        $region76: #{tpu_custom_call.1} parent=63 // pred_fallthru
          _
        // Predicated region
        $region77: #{tpu_custom_call.1} parent=63 // pred_check
          %p459 = pneg %p134
        $region78: #{tpu_custom_call.1} parent=63 // pred_check_branch
          %461 = sbr.rel (%p459) target = $region80
        $region79: #{tpu_custom_call.1} parent=63 // pred_region
          %462 = dma.done [#allocation9], 512
        $region80: #{tpu_custom_call.1} parent=63 // pred_fallthru
          _
        // Predicated region
        $region81: #{tpu_custom_call.1} parent=63 // pred_check
          %p463 = pneg %p176
        $region82: #{tpu_custom_call.1} parent=63 // pred_check_branch
          %465 = sbr.rel (%p463) target = $region84
        $region83: #{tpu_custom_call.1} parent=63 // pred_region
          %466 = dma.done [#allocation9], 256
        $region84: #{tpu_custom_call.1} parent=63 // pred_fallthru
          _
        // Predicated region
        $region85: #{tpu_custom_call.1} parent=63 // pred_check
          %p467 = pneg %p218
        $region86: #{tpu_custom_call.1} parent=63 // pred_check_branch
          %469 = sbr.rel (%p467) target = $region88
        $region87: #{tpu_custom_call.1} parent=63 // pred_region
          %470 = dma.done [#allocation12], 512
        $region88: #{tpu_custom_call.1} parent=63 // pred_fallthru
          _
        %s471 = sand.u32 %s34, 1
        %s472 = scalar_lea.sflag [#allocation3], %s471
        %s473 = sand.u32 %s252, 1
        %s474 = smul.addr %s473, 8
        %s475 = scalar_lea.vmem [#allocation13], %s474
        // Predicated region
        $region89: #{tpu_custom_call.1} parent=63 // pred_check
          %p476 = pneg %p265
        $region90: #{tpu_custom_call.1} parent=63 // pred_check_branch
          %478 = sbr.rel (%p476) target = $region92
        $region91: #{tpu_custom_call.1} parent=63 // pred_region
          %479 = dma.done %s472, 128
        $region92: #{tpu_custom_call.1} parent=63 // pred_fallthru
          _
        %p480 = pneg %p50
        %p481 = pneg %p47
        %p482 = pneg %p71
        %p483 = pneg %p68
        %p484 = pneg %p92
        %p485 = pneg %p89
        %p486 = pneg %p113
        %p487 = pneg %p110
        %p488 = pneg %p134
        %p489 = pneg %p131
        %p490 = pneg %p155
        %p491 = pneg %p152
        %p492 = pneg %p176
        %p493 = pneg %p173
        %p494 = pneg %p197
        %p495 = pneg %p194
        %p496 = pneg %p218
        %p497 = pneg %p215
        %p498 = pneg %p239
        %p499 = pneg %p236
        %s500 = sand.u32 %s34, 1
        %s501 = scalar_lea.sflag [#allocation3], %s500
        %s502 = sand.u32 %s252, 1
        %s503 = smul.addr %s502, 8
        %s504 = scalar_lea.vmem [#allocation13], %s503
        %p505 = pneg %p265
        %p506 = pneg %p262
        %p507 = pneg %p291
        %p508 = pneg %p288
        %s509 = sand.u32 %s278, 1
        %s510 = scalar_lea.sflag [#allocation4], %s509
        %s511 = sand.u32 %s278, 1
        %s512 = smul.addr %s511, 8
        %s513 = scalar_lea.vmem [#allocation14], %s512
        %p514 = pneg %p317
        %p515 = pneg %p314
        %s516 = sand.u32 %s304, 1
        %s517 = scalar_lea.sflag [#allocation16], %s516
        %s518 = sand.u32 %s304, 1
        %s519 = smul.addr %s518, 8
        %s520 = scalar_lea.vmem [#allocation15], %s519
        %v521 = vld [vmem:[#allocation2] sm:$0xff]
        %v522 = vld [vmem:[#allocation7] sm:$0xff]
        %v523 = vld [vmem:[#allocation7 + $0x8] sm:$0xff]
        %v524 = vld [vmem:[%s3] sm:$0x1]
        %v525 = vld [vmem:[#allocation8] sm:$0xff]
        %v526 = vld [vmem:[#allocation8 + $0x8] sm:$0xff]
        %v527 = vld [vmem:[#allocation8 + $0x10] sm:$0xff]
        %v528 = vld [vmem:[#allocation8 + $0x18] sm:$0xff]
        %v529 = vld [vmem:[%s5] sm:$0x1]
        %v531 = vlaneseq
        %v532 = vshrl.u32 %v531, 7
        %v533 = vsub.s32 0, %v532
        %v534 = vrot.slane %v524, %v533
        %vm536 = vcmask 130048
        %v538 = vsel %vm536, %v521, 0
        %540 = vmatprep.subr.mxu0 0.0
        %541 = vmatpush1.msra.mxu0 0.0
        %542 = vmatprep.subr.mxu0 0.0
        %543 = vmatpush1.msra.mxu0 0.0
        %544 = vmatprep.subr.mxu0 0.0
        %545 = vmatpush1.msra.mxu0 0.0
        %546 = vmatprep.subr.mxu0 0.0
        %547 = vmatpush1.msra.mxu0 0.0
        %548 = vmatprep.subr.mxu0 0.0
        %549 = vmatpush1.msra.mxu0 0.0
        %550 = vmatprep.subr.mxu0 0.0
        %551 = vmatpush1.msra.mxu0 0.0
        %552 = vmatprep.subr.mxu0 0.0
        %553 = vmatpush1.msra.mxu0 0.0
        %554 = vmatprep.subr.mxu0 0.0
        %555 = vmatpush1.msra.mxu0 0.0
        %556 = vmatprep.subr.mxu0 0.0
        %557 = vmatpush1.msra.mxu0 0.0
        %558 = vmatprep.subr.mxu0 0.0
        %559 = vmatpush1.msra.mxu0 0.0
        %560 = vmatprep.subr.mxu0 0.0
        %561 = vmatpush1.msra.mxu0 0.0
        %562 = vmatprep.subr.mxu0 0.0
        %563 = vmatpush1.msra.mxu0 0.0
        %564 = vmatprep.subr.mxu0 0.0
        %565 = vmatpush1.msra.mxu0 0.0
        %566 = vmatprep.subr.mxu0 0.0
        %567 = vmatpush1.msra.mxu0 0.0
        %568 = vmatprep.subr.mxu0 0.0
        %569 = vmatpush1.msra.mxu0 %v523
        %570 = vmatprep.subr.mxu0 0.0
        %571 = vmatpush1.msra.mxu0 %v522
        %572 = vmatprep.subr.mxu0 0.0
        %573 = vmatpush2.msra.mxu0 0.0
        %574 = vmatprep.subr.mxu0 0.0
        %575 = vmatpush2.msra.mxu0 0.0
        %576 = vmatprep.subr.mxu0 0.0
        %577 = vmatpush2.msra.mxu0 0.0
        %578 = vmatprep.subr.mxu0 0.0
        %579 = vmatpush2.msra.mxu0 0.0
        %580 = vmatprep.subr.mxu0 0.0
        %581 = vmatpush2.msra.mxu0 0.0
        %582 = vmatprep.subr.mxu0 0.0
        %583 = vmatpush2.msra.mxu0 0.0
        %584 = vmatprep.subr.mxu0 0.0
        %585 = vmatpush2.msra.mxu0 0.0
        %586 = vmatprep.subr.mxu0 0.0
        %587 = vmatpush2.msra.mxu0 0.0
        %588 = vmatprep.subr.mxu0 0.0
        %589 = vmatpush2.msra.mxu0 0.0
        %590 = vmatprep.subr.mxu0 0.0
        %591 = vmatpush2.msra.mxu0 0.0
        %592 = vmatprep.subr.mxu0 0.0
        %593 = vmatpush2.msra.mxu0 0.0
        %594 = vmatprep.subr.mxu0 0.0
        %595 = vmatpush2.msra.mxu0 0.0
        %596 = vmatprep.subr.mxu0 0.0
        %597 = vmatpush2.msra.mxu0 0.0
        %598 = vmatprep.subr.mxu0 0.0
        %599 = vmatpush2.msra.mxu0 0.0
        %600 = vmatprep.subr.mxu0 0.0
        %601 = vmatpush2.msra.mxu0 0.0
        %602 = vmatprep.subr.mxu0 0.0
        %603 = vmatpush2.msra.mxu0 0.0
        %604 = vmatprep.mubr.f32.mxu0 0.0
        %605 = vmatmul.mubr.f32.gmra.mxu0 %v538
        %v606 = vpop.f32.mrf.mxu0
        %v607 = vadd.f32 %v534, %v606
        %v608 = vpop.f32.mrf.mxu0
        %609 = vdwg.mxu0
        %v610 = vmax.f32 %v607, 0.0
        %v612 = vlaneseq
        %v613 = vshrl.u32 %v612, 7
        %v614 = vsub.s32 0, %v613
        %v615 = vrot.slane %v529, %v614
        %vm617 = vcmask 261120
        %v619 = vsel %vm617, %v610, 0
        %621 = vmatprep.subr.mxu0 0.0
        %622 = vmatpush1.msra.mxu0 0.0
        %623 = vmatprep.subr.mxu0 0.0
        %624 = vmatpush1.msra.mxu0 0.0
        %625 = vmatprep.subr.mxu0 0.0
        %626 = vmatpush1.msra.mxu0 0.0
        %627 = vmatprep.subr.mxu0 0.0
        %628 = vmatpush1.msra.mxu0 0.0
        %629 = vmatprep.subr.mxu0 0.0
        %630 = vmatpush1.msra.mxu0 0.0
        %631 = vmatprep.subr.mxu0 0.0
        %632 = vmatpush1.msra.mxu0 0.0
        %633 = vmatprep.subr.mxu0 0.0
        %634 = vmatpush1.msra.mxu0 0.0
        %635 = vmatprep.subr.mxu0 0.0
        %636 = vmatpush1.msra.mxu0 0.0
        %637 = vmatprep.subr.mxu0 0.0
        %638 = vmatpush1.msra.mxu0 0.0
        %639 = vmatprep.subr.mxu0 0.0
        %640 = vmatpush1.msra.mxu0 0.0
        %641 = vmatprep.subr.mxu0 0.0
        %642 = vmatpush1.msra.mxu0 0.0
        %643 = vmatprep.subr.mxu0 0.0
        %644 = vmatpush1.msra.mxu0 0.0
        %645 = vmatprep.subr.mxu0 0.0
        %646 = vmatpush1.msra.mxu0 %v528
        %647 = vmatprep.subr.mxu0 0.0
        %648 = vmatpush1.msra.mxu0 %v527
        %649 = vmatprep.subr.mxu0 0.0
        %650 = vmatpush1.msra.mxu0 %v526
        %651 = vmatprep.subr.mxu0 0.0
        %652 = vmatpush1.msra.mxu0 %v525
        %653 = vmatprep.subr.mxu0 0.0
        %654 = vmatpush2.msra.mxu0 0.0
        %655 = vmatprep.subr.mxu0 0.0
        %656 = vmatpush2.msra.mxu0 0.0
        %657 = vmatprep.subr.mxu0 0.0
        %658 = vmatpush2.msra.mxu0 0.0
        %659 = vmatprep.subr.mxu0 0.0
        %660 = vmatpush2.msra.mxu0 0.0
        %661 = vmatprep.subr.mxu0 0.0
        %662 = vmatpush2.msra.mxu0 0.0
        %663 = vmatprep.subr.mxu0 0.0
        %664 = vmatpush2.msra.mxu0 0.0
        %665 = vmatprep.subr.mxu0 0.0
        %666 = vmatpush2.msra.mxu0 0.0
        %667 = vmatprep.subr.mxu0 0.0
        %668 = vmatpush2.msra.mxu0 0.0
        %669 = vmatprep.subr.mxu0 0.0
        %670 = vmatpush2.msra.mxu0 0.0
        %671 = vmatprep.subr.mxu0 0.0
        %672 = vmatpush2.msra.mxu0 0.0
        %673 = vmatprep.subr.mxu0 0.0
        %674 = vmatpush2.msra.mxu0 0.0
        %675 = vmatprep.subr.mxu0 0.0
        %676 = vmatpush2.msra.mxu0 0.0
        %677 = vmatprep.subr.mxu0 0.0
        %678 = vmatpush2.msra.mxu0 0.0
        %679 = vmatprep.subr.mxu0 0.0
        %680 = vmatpush2.msra.mxu0 0.0
        %681 = vmatprep.subr.mxu0 0.0
        %682 = vmatpush2.msra.mxu0 0.0
        %683 = vmatprep.subr.mxu0 0.0
        %684 = vmatpush2.msra.mxu0 0.0
        %685 = vmatprep.mubr.f32.mxu0 0.0
        %686 = vmatmul.mubr.f32.gmra.mxu0 %v619
        %v687 = vpop.f32.mrf.mxu0
        %v688 = vadd.f32 %v615, %v687
        %v689 = vpop.f32.mrf.mxu0
        %690 = vdwg.mxu0
        %v691 = vxor.u32 %v688, 2147483648
        %v692 = vmul.f32 %v691, 1.442695
        %v693 = vpow.pop %v692
        %v694 = vadd.f32 %v693, 1.0
        %v695 = vrcp.pop %v694
        %v696 = vmul.f32 1.0, %v695
        %v697 = vmul.f32 %v696, 2.0
        %v698 = vld [vmem:[#allocation5] sm:$0xff]
        %v699 = vld [vmem:[#allocation10] sm:$0xff]
        %v700 = vld [vmem:[#allocation10 + $0x8] sm:$0xff]
        %v701 = vld [vmem:[%s7] sm:$0x1]
        %v702 = vld [vmem:[#allocation11] sm:$0xff]
        %v703 = vld [vmem:[#allocation11 + $0x8] sm:$0xff]
        %v704 = vld [vmem:[#allocation11 + $0x10] sm:$0xff]
        %v705 = vld [vmem:[#allocation11 + $0x18] sm:$0xff]
        %v706 = vld [vmem:[%s9] sm:$0x1]
        %v708 = vlaneseq
        %v709 = vshrl.u32 %v708, 7
        %v710 = vsub.s32 0, %v709
        %v711 = vrot.slane %v701, %v710
        %v714 = vsel %vm536, %v698, 0
        %716 = vmatprep.subr.mxu0 0.0
        %717 = vmatpush1.msra.mxu0 0.0
        %718 = vmatprep.subr.mxu0 0.0
        %719 = vmatpush1.msra.mxu0 0.0
        %720 = vmatprep.subr.mxu0 0.0
        %721 = vmatpush1.msra.mxu0 0.0
        %722 = vmatprep.subr.mxu0 0.0
        %723 = vmatpush1.msra.mxu0 0.0
        %724 = vmatprep.subr.mxu0 0.0
        %725 = vmatpush1.msra.mxu0 0.0
        %726 = vmatprep.subr.mxu0 0.0
        %727 = vmatpush1.msra.mxu0 0.0
        %728 = vmatprep.subr.mxu0 0.0
        %729 = vmatpush1.msra.mxu0 0.0
        %730 = vmatprep.subr.mxu0 0.0
        %731 = vmatpush1.msra.mxu0 0.0
        %732 = vmatprep.subr.mxu0 0.0
        %733 = vmatpush1.msra.mxu0 0.0
        %734 = vmatprep.subr.mxu0 0.0
        %735 = vmatpush1.msra.mxu0 0.0
        %736 = vmatprep.subr.mxu0 0.0
        %737 = vmatpush1.msra.mxu0 0.0
        %738 = vmatprep.subr.mxu0 0.0
        %739 = vmatpush1.msra.mxu0 0.0
        %740 = vmatprep.subr.mxu0 0.0
        %741 = vmatpush1.msra.mxu0 0.0
        %742 = vmatprep.subr.mxu0 0.0
        %743 = vmatpush1.msra.mxu0 0.0
        %744 = vmatprep.subr.mxu0 0.0
        %745 = vmatpush1.msra.mxu0 %v700
        %746 = vmatprep.subr.mxu0 0.0
        %747 = vmatpush1.msra.mxu0 %v699
        %748 = vmatprep.subr.mxu0 0.0
        %749 = vmatpush2.msra.mxu0 0.0
        %750 = vmatprep.subr.mxu0 0.0
        %751 = vmatpush2.msra.mxu0 0.0
        %752 = vmatprep.subr.mxu0 0.0
        %753 = vmatpush2.msra.mxu0 0.0
        %754 = vmatprep.subr.mxu0 0.0
        %755 = vmatpush2.msra.mxu0 0.0
        %756 = vmatprep.subr.mxu0 0.0
        %757 = vmatpush2.msra.mxu0 0.0
        %758 = vmatprep.subr.mxu0 0.0
        %759 = vmatpush2.msra.mxu0 0.0
        %760 = vmatprep.subr.mxu0 0.0
        %761 = vmatpush2.msra.mxu0 0.0
        %762 = vmatprep.subr.mxu0 0.0
        %763 = vmatpush2.msra.mxu0 0.0
        %764 = vmatprep.subr.mxu0 0.0
        %765 = vmatpush2.msra.mxu0 0.0
        %766 = vmatprep.subr.mxu0 0.0
        %767 = vmatpush2.msra.mxu0 0.0
        %768 = vmatprep.subr.mxu0 0.0
        %769 = vmatpush2.msra.mxu0 0.0
        %770 = vmatprep.subr.mxu0 0.0
        %771 = vmatpush2.msra.mxu0 0.0
        %772 = vmatprep.subr.mxu0 0.0
        %773 = vmatpush2.msra.mxu0 0.0
        %774 = vmatprep.subr.mxu0 0.0
        %775 = vmatpush2.msra.mxu0 0.0
        %776 = vmatprep.subr.mxu0 0.0
        %777 = vmatpush2.msra.mxu0 0.0
        %778 = vmatprep.subr.mxu0 0.0
        %779 = vmatpush2.msra.mxu0 0.0
        %780 = vmatprep.mubr.f32.mxu0 0.0
        %781 = vmatmul.mubr.f32.gmra.mxu0 %v714
        %v782 = vpop.f32.mrf.mxu0
        %v783 = vadd.f32 %v711, %v782
        %v784 = vpop.f32.mrf.mxu0
        %785 = vdwg.mxu0
        %v786 = vmax.f32 %v783, 0.0
        %v788 = vlaneseq
        %v789 = vshrl.u32 %v788, 7
        %v790 = vsub.s32 0, %v789
        %v791 = vrot.slane %v706, %v790
        %v794 = vsel %vm617, %v786, 0
        %796 = vmatprep.subr.mxu0 0.0
        %797 = vmatpush1.msra.mxu0 0.0
        %798 = vmatprep.subr.mxu0 0.0
        %799 = vmatpush1.msra.mxu0 0.0
        %800 = vmatprep.subr.mxu0 0.0
        %801 = vmatpush1.msra.mxu0 0.0
        %802 = vmatprep.subr.mxu0 0.0
        %803 = vmatpush1.msra.mxu0 0.0
        %804 = vmatprep.subr.mxu0 0.0
        %805 = vmatpush1.msra.mxu0 0.0
        %806 = vmatprep.subr.mxu0 0.0
        %807 = vmatpush1.msra.mxu0 0.0
        %808 = vmatprep.subr.mxu0 0.0
        %809 = vmatpush1.msra.mxu0 0.0
        %810 = vmatprep.subr.mxu0 0.0
        %811 = vmatpush1.msra.mxu0 0.0
        %812 = vmatprep.subr.mxu0 0.0
        %813 = vmatpush1.msra.mxu0 0.0
        %814 = vmatprep.subr.mxu0 0.0
        %815 = vmatpush1.msra.mxu0 0.0
        %816 = vmatprep.subr.mxu0 0.0
        %817 = vmatpush1.msra.mxu0 0.0
        %818 = vmatprep.subr.mxu0 0.0
        %819 = vmatpush1.msra.mxu0 0.0
        %820 = vmatprep.subr.mxu0 0.0
        %821 = vmatpush1.msra.mxu0 %v705
        %822 = vmatprep.subr.mxu0 0.0
        %823 = vmatpush1.msra.mxu0 %v704
        %824 = vmatprep.subr.mxu0 0.0
        %825 = vmatpush1.msra.mxu0 %v703
        %826 = vmatprep.subr.mxu0 0.0
        %827 = vmatpush1.msra.mxu0 %v702
        %828 = vmatprep.subr.mxu0 0.0
        %829 = vmatpush2.msra.mxu0 0.0
        %830 = vmatprep.subr.mxu0 0.0
        %831 = vmatpush2.msra.mxu0 0.0
        %832 = vmatprep.subr.mxu0 0.0
        %833 = vmatpush2.msra.mxu0 0.0
        %834 = vmatprep.subr.mxu0 0.0
        %835 = vmatpush2.msra.mxu0 0.0
        %836 = vmatprep.subr.mxu0 0.0
        %837 = vmatpush2.msra.mxu0 0.0
        %838 = vmatprep.subr.mxu0 0.0
        %839 = vmatpush2.msra.mxu0 0.0
        %840 = vmatprep.subr.mxu0 0.0
        %841 = vmatpush2.msra.mxu0 0.0
        %842 = vmatprep.subr.mxu0 0.0
        %843 = vmatpush2.msra.mxu0 0.0
        %844 = vmatprep.subr.mxu0 0.0
        %845 = vmatpush2.msra.mxu0 0.0
        %846 = vmatprep.subr.mxu0 0.0
        %847 = vmatpush2.msra.mxu0 0.0
        %848 = vmatprep.subr.mxu0 0.0
        %849 = vmatpush2.msra.mxu0 0.0
        %850 = vmatprep.subr.mxu0 0.0
        %851 = vmatpush2.msra.mxu0 0.0
        %852 = vmatprep.subr.mxu0 0.0
        %853 = vmatpush2.msra.mxu0 0.0
        %854 = vmatprep.subr.mxu0 0.0
        %855 = vmatpush2.msra.mxu0 0.0
        %856 = vmatprep.subr.mxu0 0.0
        %857 = vmatpush2.msra.mxu0 0.0
        %858 = vmatprep.subr.mxu0 0.0
        %859 = vmatpush2.msra.mxu0 0.0
        %860 = vmatprep.mubr.f32.mxu0 0.0
        %861 = vmatmul.mubr.f32.gmra.mxu0 %v794
        %v862 = vpop.f32.mrf.mxu0
        %v863 = vadd.f32 %v791, %v862
        %v864 = vpop.f32.mrf.mxu0
        %865 = vdwg.mxu0
        %v866 = vxor.u32 %v863, 2147483648
        %v867 = vmul.f32 %v866, 1.442695
        %v868 = vpow.pop %v867
        %v869 = vadd.f32 %v868, 1.0
        %v870 = vrcp.pop %v869
        %v871 = vmul.f32 1.0, %v870
        %v872 = vmul.f32 %v871, 2.0
        %v873 = vld [vmem:[%s475] sm:$0xff]
        %v874 = vlaneseq
        %v875 = vshrl.u32 %v874, 7
        %v876 = vsub.s32 0, %v875
        %v877 = vrot.slane %v697, %v876
        %v878 = vmul.f32 %v873, %v877
        %879 = vst [vmem:[%s513] sm:$0xff] %v878
        %v880 = vlaneseq
        %v881 = vshrl.u32 %v880, 7
        %v882 = vsub.s32 0, %v881
        %v883 = vrot.slane %v872, %v882
        %v884 = vmul.f32 %v873, %v883
        %885 = vst [vmem:[%s520] sm:$0xff] %v884
        %s886 = sand.u32 %s278, 1
        %s887 = scalar_lea.sflag [#allocation4], %s886
        %s888 = sand.u32 %s278, 1
        %s889 = smul.addr %s888, 8
        %s890 = scalar_lea.vmem [#allocation14], %s889
        %s891 = sand.u32 %s304, 1
        %s892 = scalar_lea.sflag [#allocation16], %s891
        %s893 = sand.u32 %s304, 1
        %s894 = smul.addr %s893, 8
        %s895 = scalar_lea.vmem [#allocation15], %s894
        // Predicated region
        $region93: #{tpu_custom_call.1} parent=63 // pred_check
          %p896 = pneg %p288
        $region94: #{tpu_custom_call.1} parent=63 // pred_check_branch
          %898 = sbr.rel (%p896) target = $region96
        $region95: #{tpu_custom_call.1} parent=63 // pred_region
          %s900 = ssub.s32 128, 128
          %901 = vsyncadd %s887, %s900
          %s902 = smul.addr %s34, 128
          %s903 = scalar_lea.hbm %s11, %s902
          %s905 = sshll.u32 %s890, 4
          %s906 = int_to_ptr.vmem [resolvable:$true] %s905
          %908 = dma.vmem_to_hbm [thread:$0]  %s906, 128, %s903, %s887
        $region96: #{tpu_custom_call.1} parent=63 // pred_fallthru
          _
        // Predicated region
        $region97: #{tpu_custom_call.1} parent=63 // pred_check
          %p909 = pneg %p314
        $region98: #{tpu_custom_call.1} parent=63 // pred_check_branch
          %911 = sbr.rel (%p909) target = $region100
        $region99: #{tpu_custom_call.1} parent=63 // pred_region
          %s913 = ssub.s32 128, 128
          %914 = vsyncadd %s892, %s913
          %s915 = smul.addr %s34, 128
          %s916 = scalar_lea.hbm %s12, %s915
          %s918 = sshll.u32 %s895, 4
          %s919 = int_to_ptr.vmem [resolvable:$true] %s918
          %921 = dma.vmem_to_hbm [thread:$0]  %s919, 128, %s916, %s892
        $region100: #{tpu_custom_call.1} parent=63 // pred_fallthru
          _
      $region64: #{tpu_custom_call.1} parent=5 // pred_fallthru
        _
      %p922 = scmp.le.s32.totalorder 2, %s29
      // Predicated region
      $region101: #{tpu_custom_call.1} parent=5 // pred_check
        %p923 = pneg %p922
      $region102: #{tpu_custom_call.1} parent=5 // pred_check_branch
        %925 = sbr.rel (%p923) target = $region104
      $region103: #{tpu_custom_call.1} parent=5 // pred_region
        %s926 = ssub.s32 %s29, 2
        // Predicated region
        $region105: #{tpu_custom_call.1} parent=103 // pred_check
          %p927 = pneg %p294
        $region106: #{tpu_custom_call.1} parent=103 // pred_check_branch
          %929 = sbr.rel (%p927) target = $region108
        $region107: #{tpu_custom_call.1} parent=103 // pred_region
          %s930 = sand.u32 %s279, 1
          %s931 = scalar_lea.sflag [#allocation4], %s930
          %s932 = sand.u32 %s279, 1
          %s933 = smul.addr %s932, 8
          %s934 = scalar_lea.vmem [#allocation14], %s933
          %935 = dma.done %s931, 128
        $region108: #{tpu_custom_call.1} parent=103 // pred_fallthru
          _
        // Predicated region
        $region109: #{tpu_custom_call.1} parent=103 // pred_check
          %p936 = pneg %p320
        $region110: #{tpu_custom_call.1} parent=103 // pred_check_branch
          %938 = sbr.rel (%p936) target = $region112
        $region111: #{tpu_custom_call.1} parent=103 // pred_region
          %s939 = sand.u32 %s305, 1
          %s940 = scalar_lea.sflag [#allocation16], %s939
          %s941 = sand.u32 %s305, 1
          %s942 = smul.addr %s941, 8
          %s943 = scalar_lea.vmem [#allocation15], %s942
          %944 = dma.done %s940, 128
        $region112: #{tpu_custom_call.1} parent=103 // pred_fallthru
          _
      $region104: #{tpu_custom_call.1} parent=5 // pred_fallthru
        _
    $region6: #{tpu_custom_call.1} parent=1 // loop_footer
      %s33 = sadd.s32 1, %s29
    $region7: #{tpu_custom_call.1} parent=1 // loop_footer_branch
      %28 = sbr.rel target = $region3
    $region8: #{tpu_custom_call.1} parent=1 // loop_exit
      _
    %945 = vsyncpa [#allocation3], 1
    %s946 = scalar_lea.sflag [#allocation3], 1
    %947 = vsyncpa %s946, 1
    %948 = vsyncpa [#allocation6], 1
    %949 = vsyncpa [#allocation9], 1
    %950 = vsyncpa [#allocation12], 1
    %951 = vsyncpa [#allocation4], 1
    %s952 = scalar_lea.sflag [#allocation4], 1
    %953 = vsyncpa %s952, 1
    %954 = vsyncpa [#allocation16], 1
    %s955 = scalar_lea.sflag [#allocation16], 1
    %956 = vsyncpa %s955, 1

</llo_original>
